<compile_context>
chip_gen: v6e
topology: v6e:2x2x1
jax: 0.10.0
libtpu: 0.0.40
codegen_flags: <defaults>
</compile_context>

<pallas_src>
import jax
import jax.numpy as jnp
from jax.experimental import pallas as pl
from jax.experimental.pallas import tpu as pltpu


_LANE = 128
_MAX_COLS = 2048              # lane-dense width: 16 vregs per sublane row
_BLOCK_BYTES = 2 << 20        # ~2 MiB per block; in+out double-buffered = ~8 MiB VMEM


def _copy_kernel(x_ref, o_ref):
    o_ref[...] = x_ref[...]


def _resolve_size(size, numel):
    """PyTorch-style view-size resolution (supports a single -1)."""
    if isinstance(size, int):
        size = (size,)
    size = tuple(int(s) for s in size)
    if size.count(-1) > 1:
        raise ValueError("only one dimension can be inferred (-1)")
    if -1 in size:
        known = 1
        for s in size:
            if s != -1:
                known *= s
        if known == 0 or numel % known != 0:
            raise ValueError(f"cannot view {numel} elements as {size}")
        size = tuple(numel // known if s == -1 else s for s in size)
    total = 1
    for s in size:
        total *= s
    if total != numel:
        raise ValueError(f"cannot view {numel} elements as {size}")
    return size


def _factor_flat(n, itemsize):
    """Factor n elements into (rows, cols, tile_rows) with cols a multiple of 128 when
    possible and tile_rows dividing rows exactly, so no padding or masking is needed."""
    if n % _LANE != 0:
        return 1, n, 1                      # single full-dim block (block == array dims is legal)
    cols = _LANE
    while cols * 2 <= _MAX_COLS and n % (cols * 2) == 0:
        cols *= 2
    rows = n // cols
    max_tm = max(1, _BLOCK_BYTES // (cols * itemsize))
    if rows <= max_tm:
        return rows, cols, rows             # single block
    tm = (max_tm // 8) * 8                  # keep sublane dim a multiple of 8
    while tm >= 8:
        if rows % tm == 0:
            return rows, cols, tm
        tm -= 8
    return rows, cols, rows                 # no clean divisor: fall back to one big block


def pallas_view(x, size):
    """Equivalent of torch.Tensor.view(size) (materialized) via one Pallas copy kernel."""
    n = x.size
    out_shape = _resolve_size(size, n)
    rows, cols, tm = _factor_flat(n, x.dtype.itemsize)

    # Metadata-only reshapes (contiguous) around the kernel; the kernel does the copy.
    flat2d = jnp.reshape(x, (rows, cols))

    # Note: with input_output_aliases={0: 0} the copy could be elided entirely (a view
    # is metadata-only), but that would donate x; kept as a non-destructive forward.
    out2d = pl.pallas_call(
        _copy_kernel,
        out_shape=jax.ShapeDtypeStruct((rows, cols), x.dtype),
        grid=(rows // tm,),
        in_specs=[pl.BlockSpec((tm, cols), lambda i: (i, 0))],
        out_specs=pl.BlockSpec((tm, cols), lambda i: (i, 0)),
        compiler_params=pltpu.CompilerParams(
            dimension_semantics=("parallel",)),
    )(flat2d)

    return jnp.reshape(out2d, out_shape)


class MyView:
    """Pallas equivalent of the PyTorch MyView module: forward(x) = x.view(self.size)."""

    def __init__(self, size):
        self.size = size

    def __call__(self, x):
        return pallas_view(x, self.size)


if __name__ == "__main__":
    key = jax.random.PRNGKey(0)
    k1, k2 = jax.random.split(key)

    # Primary test: small spec-consistent shape. (2,4,16,16) -> view (2, -1) == (2, 1024).
    x = jax.random.normal(k1, (2, 4, 16, 16), jnp.float32)
    view = MyView((2, -1))
    y = jax.block_until_ready(view(x))
    assert y.shape == (2, 1024) and y.dtype == x.dtype, (y.shape, y.dtype)
    assert bool(jnp.array_equal(y, jnp.reshape(x, (2, 1024))))

    # Secondary test: large enough to exercise the multi-block, parallel-grid path
    # (rows=512, cols=2048 -> two 2 MiB blocks sharded across TCs on v7x).
    x2 = jax.random.normal(k2, (16, 4, 128, 128), jnp.float32)
    y2 = jax.block_until_ready(MyView((16, 4, 128 * 128))(x2))
    assert y2.shape == (16, 4, 16384) and y2.dtype == x2.dtype
    assert bool(jnp.array_equal(y2, jnp.reshape(x2, y2.shape)))

    print("KERNEL_OK")
</pallas_src>

<mosaic_0001>
module attributes {stable_mosaic.version = 11 : i64} {
  func.func @_copy_kernel(%arg0: i32, %arg1: memref<1x2048xf32, #tpu.memory_space<vmem>>, %arg2: memref<1x2048xf32, #tpu.memory_space<vmem>>) attributes {dimension_semantics = [#tpu.dimension_semantics<parallel>], iteration_bounds = array<i64: 1>, scalar_prefetch = 0 : i64, scratch_operands = 0 : i64, tpu.core_type = #tpu.core_type<tc>, window_params = [{transform_indices = @transform_0, window_bounds = array<i64: 1, 2048>}, {transform_indices = @transform_1, window_bounds = array<i64: 1, 2048>}]} {
    %c0 = arith.constant 0 : index
    %c0_0 = arith.constant 0 : index
    %0 = vector.load %arg1[%c0, %c0_0] : memref<1x2048xf32, #tpu.memory_space<vmem>>, vector<1x2048xf32>
    %c0_1 = arith.constant 0 : index
    %c0_2 = arith.constant 0 : index
    %1 = vector.load %arg2[%c0_1, %c0_2] : memref<1x2048xf32, #tpu.memory_space<vmem>>, vector<1x2048xf32>
    tpu.vector_store %arg2[%c0_1, %c0_2], %0 {strides = array<i32>} : memref<1x2048xf32, #tpu.memory_space<vmem>>, vector<1x2048xf32>,
    return
  }
  func.func @transform_0(%arg0: i32) -> (i32, i32) {
    %c0_i32 = arith.constant 0 : i32
    %c0_i32_0 = arith.constant 0 : i32
    return %arg0, %c0_i32 : i32, i32
  }
  func.func @transform_1(%arg0: i32) -> (i32, i32) {
    %c0_i32 = arith.constant 0 : i32
    %c0_i32_0 = arith.constant 0 : i32
    return %arg0, %c0_i32 : i32, i32
  }
}

</mosaic_0001>

<llo_original>
// kernel: tpu_custom_call.1
$region0: #{tpu_custom_call.1}
  #allocation0 [shape = 'u32[]', space=smem, size = 0x4, offset = 0x4, fixed_abs, tag = 'smem constant byte address 0x4 - core index']
  #allocation1 [shape = 'u32[144,128]{1,0:T(1,128)}', space=vmem, size = 0x12000, scoped, tag = 'internal scratch']
  %s0 = inlined_call_operand.hbm [shape: f32[1,2048], index: 0, kind: input, shape index: {}]
  %s1 = inlined_call_operand.hbm [shape: f32[1,2048], index: 1, kind: output, shape index: {}]
  %s2 = sld [smem:[#allocation0]]
  $region18: #{tpu_custom_call.1} parent=0
    _
  %s4 = ssub.s32 1, %s2
  %s5 = scalar_select 0, %s4, %s2
  $region1: #{tpu_custom_call.1} parent=0
    #allocation2 [shape = 'u8[8192]{0}', space=vmem, size = 0x2000, scoped, tag = 'input window, operand 0, single buffered']
    #allocation3 [shape = 's32[1]{0}', space=sflag, size = 0x4, scoped, tag = 'scoped memory for tpu_custom_call.1']
    #allocation4 [shape = 's32[1]{0}', space=sflag, size = 0x4, scoped, tag = 'scoped memory for tpu_custom_call.1']
    #allocation5 [shape = 'u8[8192]{0}', space=vmem, size = 0x2000, scoped, tag = 'output window, operand 0, single buffered']
    %6 = vsyncpa [#allocation3], 0
    %7 = vsyncpa [#allocation4], 0
    // Predicated region
    $region2: #{tpu_custom_call.1} parent=1 // pred_check
      _
    $region3: #{tpu_custom_call.1} parent=1 // pred_check_branch
      %9 = sbr.rel (0) target = $region5
    $region4: #{tpu_custom_call.1} parent=1 // pred_region
      %s11 = ssub.s32 256, 256
      %12 = vsyncadd [#allocation3], %s11
      %s14 = sshll.u32 [#allocation2], 4
      %s15 = int_to_ptr.vmem [resolvable:$true] %s14
      %17 = dma.hbm_to_vmem [thread:$0]  %s0, 256, %s15, [#allocation3]
    $region5: #{tpu_custom_call.1} parent=1 // pred_fallthru
      _
    // Predicated region
    $region6: #{tpu_custom_call.1} parent=1 // pred_check
      _
    $region7: #{tpu_custom_call.1} parent=1 // pred_check_branch
      %19 = sbr.rel (0) target = $region9
    $region8: #{tpu_custom_call.1} parent=1 // pred_region
      %20 = dma.done [#allocation3], 256
    $region9: #{tpu_custom_call.1} parent=1 // pred_fallthru
      _
    %v21 = vld [vmem:[#allocation2] sm:$0xff]
    %v22 = vld [vmem:[#allocation2 + $0x8] sm:$0xff]
    %23 = vst [vmem:[#allocation5] sm:$0xff] %v21
    %24 = vst [vmem:[#allocation5 + $0x8] sm:$0xff] %v22
    // Predicated region
    $region10: #{tpu_custom_call.1} parent=1 // pred_check
      _
    $region11: #{tpu_custom_call.1} parent=1 // pred_check_branch
      %26 = sbr.rel (0) target = $region13
    $region12: #{tpu_custom_call.1} parent=1 // pred_region
      %s28 = ssub.s32 256, 256
      %29 = vsyncadd [#allocation4], %s28
      %s31 = sshll.u32 [#allocation5], 4
      %s32 = int_to_ptr.vmem [resolvable:$true] %s31
      %34 = dma.vmem_to_hbm [thread:$0]  %s32, 256, %s1, [#allocation4]
    $region13: #{tpu_custom_call.1} parent=1 // pred_fallthru
      _
    // Predicated region
    $region14: #{tpu_custom_call.1} parent=1 // pred_check
      _
    $region15: #{tpu_custom_call.1} parent=1 // pred_check_branch
      %36 = sbr.rel (0) target = $region17
    $region16: #{tpu_custom_call.1} parent=1 // pred_region
      %37 = dma.done [#allocation4], 256
    $region17: #{tpu_custom_call.1} parent=1 // pred_fallthru
      _
    %38 = vsyncpa [#allocation3], 1
    %39 = vsyncpa [#allocation4], 1

</llo_original>
